<compile_context>
chip_gen: v7x
topology: tpu7x:2x2x1
jax: 0.10.0
libtpu: 0.0.40
codegen_flags: <defaults>
</compile_context>

<pallas_src>
import jax
import jax.numpy as jnp
from jax.experimental import pallas as pl
from jax.experimental.pallas import tpu as pltpu


def _round_up(x: int, m: int) -> int:
    return ((x + m - 1) // m) * m


def _choose_tile_rows(n_rows: int, k: int, d_out: int, itemsize: int,
                      budget_bytes: int = 8 * 1024 * 1024) -> int:
    """Largest row tile (multiple of 8, <=2048) whose double-buffered
    input+output tiles fit a conservative VMEM budget on v5e/v6e/v7x."""
    per_row = 2 * (k + d_out) * itemsize          # x2 for double buffering
    tn = budget_bytes // max(per_row, 1)
    tn = int(max(8, min(tn, 2048)))
    tn = (tn // 8) * 8
    tn = min(tn, _round_up(max(n_rows, 1), 8))    # never bigger than the problem
    return max(tn, 8)


def _embed_kernel(x_ref, w_ref, b_ref, o_ref):
    # x_ref: (TN, K)   tile of rows, K = patch_length
    # w_ref: (K, Dp)   projection weight, output dim padded to multiple of 128
    # b_ref: (1, Dp)   projection bias (f32), zero-padded
    # o_ref: (TN, Dp)  lane-dense output tile
    acc = jnp.dot(x_ref[...], w_ref[...], preferred_element_type=jnp.float32)
    o_ref[...] = (acc + b_ref[...]).astype(o_ref.dtype)


def _linear_rows_pallas(x2d, weight, bias, out_dtype):
    """Row-wise Linear: x2d (N, K) @ weight.T + bias; weight is torch-layout
    (d_model, K). Returns (N, d_model)."""
    N, K = x2d.shape
    Dm = weight.shape[0]
    itemsize = jnp.dtype(x2d.dtype).itemsize

    # Lane-dense output: pad d_model up to a multiple of 128.
    Dp = _round_up(Dm, 128)
    w_t = jnp.pad(weight.T.astype(x2d.dtype), ((0, 0), (0, Dp - Dm)))      # (K, Dp)
    b_p = jnp.pad(bias.astype(jnp.float32), (0, Dp - Dm)).reshape(1, Dp)   # (1, Dp)

    TN = _choose_tile_rows(N, K, Dp, itemsize)
    n_tiles = pl.cdiv(N, TN)                     # partial last tile handled by Pallas

    cost = pl.CostEstimate(
        flops=2 * N * K * Dm,
        transcendentals=0,
        bytes_accessed=(N * K + K * Dm + N * Dm) * itemsize,
    )

    out = pl.pallas_call(
        _embed_kernel,
        out_shape=jax.ShapeDtypeStruct((N, Dp), out_dtype),
        grid_spec=pltpu.PrefetchScalarGridSpec(
            num_scalar_prefetch=0,
            grid=(n_tiles,),
            in_specs=[
                pl.BlockSpec((TN, K), lambda i: (i, 0)),
                pl.BlockSpec((K, Dp), lambda i: (0, 0)),   # weight resident
                pl.BlockSpec((1, Dp), lambda i: (0, 0)),   # bias resident
            ],
            out_specs=pl.BlockSpec((TN, Dp), lambda i: (i, 0)),
        ),
        compiler_params=pltpu.CompilerParams(
            dimension_semantics=("parallel",),   # row tiles independent -> megacore
        ),
        cost_estimate=cost,
    )(x2d, w_t, b_p)

    return out[:, :Dm]


def _linear_rows_per_channel_pallas(x_cm, weights, biases, out_dtype):
    """Per-channel row-wise Linear in a single pallas_call.

    x_cm:    (C, NR, K)  channel-major rows (NR = bs * num_patches)
    weights: (C, d_model, K) torch nn.Linear layout per channel
    biases:  (C, d_model)
    returns: (C, NR, d_model)
    """
    C, NR, K = x_cm.shape
    Dm = weights.shape[1]
    itemsize = jnp.dtype(x_cm.dtype).itemsize

    Dp = _round_up(Dm, 128)
    w_t = jnp.pad(jnp.transpose(weights, (0, 2, 1)).astype(x_cm.dtype),
                  ((0, 0), (0, 0), (0, Dp - Dm)))                    # (C, K, Dp)
    b_p = jnp.pad(biases.astype(jnp.float32),
                  ((0, 0), (0, Dp - Dm)))[:, None, :]                # (C, 1, Dp)

    TN = _choose_tile_rows(NR, K, Dp, itemsize)
    n_tiles = pl.cdiv(NR, TN)

    cost = pl.CostEstimate(
        flops=2 * C * NR * K * Dm,
        transcendentals=0,
        bytes_accessed=(C * NR * K + C * K * Dm + C * NR * Dm) * itemsize,
    )

    out = pl.pallas_call(
        _embed_kernel,
        out_shape=jax.ShapeDtypeStruct((C, NR, Dp), out_dtype),
        grid_spec=pltpu.PrefetchScalarGridSpec(
            num_scalar_prefetch=0,
            grid=(C, n_tiles),           # rows fastest-varying -> weight stays resident per channel
            in_specs=[
                pl.BlockSpec((None, TN, K), lambda c, i: (c, i, 0)),
                pl.BlockSpec((None, K, Dp), lambda c, i: (c, 0, 0)),
                pl.BlockSpec((None, 1, Dp), lambda c, i: (c, 0, 0)),
            ],
            out_specs=pl.BlockSpec((None, TN, Dp), lambda c, i: (c, i, 0)),
        ),
        compiler_params=pltpu.CompilerParams(
            dimension_semantics=("parallel", "parallel"),
        ),
        cost_estimate=cost,
    )(x_cm, w_t, b_p)

    return out[:, :, :Dm]


def patchtst_embedding(patch_input, weight, bias, *, min_rows_for_pallas=4096):
    """PatchTSTEmbedding.forward with share_embedding=True (HF default).

    patch_input: (bs, C, P, patch_length)
    weight:      (d_model, patch_length)   torch nn.Linear layout
    bias:        (d_model,)
    returns:     (bs, C, P, d_model)
    """
    bs, C, P, K = patch_input.shape
    Dm = weight.shape[0]
    N = bs * C * P

    if N < min_rows_for_pallas:
        # Tiny problems: pallas_call launch overhead dominates; let XLA fuse.
        out = jnp.einsum("bcpk,dk->bcpd", patch_input,
                         weight.astype(patch_input.dtype))
        return (out + bias.astype(out.dtype)).astype(patch_input.dtype)

    x2d = patch_input.reshape(N, K)                 # contiguous, free reshape
    out = _linear_rows_pallas(x2d, weight, bias, patch_input.dtype)
    return out.reshape(bs, C, P, Dm)


def patchtst_embedding_per_channel(patch_input, weights, biases, *,
                                   min_rows_for_pallas=4096):
    """PatchTSTEmbedding.forward with share_embedding=False (per-channel Linear).

    weights: (C, d_model, patch_length), biases: (C, d_model).
    Single pallas_call with grid (C, row_tiles) and channel-indexed weight spec.
    """
    bs, C, P, K = patch_input.shape
    Dm = weights.shape[1]
    NR = bs * P

    if bs * C * P < min_rows_for_pallas:
        out = jnp.einsum("bcpk,cdk->bcpd", patch_input,
                         weights.astype(patch_input.dtype))
        return (out + biases.astype(out.dtype)[None, :, None, :]
                ).astype(patch_input.dtype)

    # TODO(synk): the channel-major transpose is one extra HBM pass over the
    # input; a 3-axis grid over the native (bs, C, P, K) layout could avoid it
    # at the cost of P-divisibility handling.
    x_cm = jnp.transpose(patch_input, (1, 0, 2, 3)).reshape(C, NR, K)
    out = _linear_rows_per_channel_pallas(x_cm, weights, biases,
                                          patch_input.dtype)
    out = out.reshape(C, bs, P, Dm)
    return jnp.transpose(out, (1, 0, 2, 3))


if __name__ == "__main__":
    # Small shapes consistent with the module.
    bs = 2
    num_channels = 4       # config.num_input_channels
    num_patches = 8
    patch_length = 16      # config.patch_length
    d_model = 32           # config.d_model

    key = jax.random.PRNGKey(0)
    k_x, k_w, k_b, k_wc, k_bc = jax.random.split(key, 5)

    patch_input = jax.random.normal(
        k_x, (bs, num_channels, num_patches, patch_length), dtype=jnp.float32)

    # Deterministic synthetic params for nn.Linear(patch_length, d_model).
    bound = 1.0 / (patch_length ** 0.5)
    weight = jax.random.uniform(
        k_w, (d_model, patch_length), minval=-bound, maxval=bound,
        dtype=jnp.float32)
    bias = jax.random.uniform(
        k_b, (d_model,), minval=-bound, maxval=bound, dtype=jnp.float32)

    # Force the Pallas path even at these tiny demo shapes (real deployments
    # keep the default threshold so XLA handles tiny problems).
    out = patchtst_embedding(patch_input, weight, bias, min_rows_for_pallas=0)
    out = jax.block_until_ready(out)

    # Pure-JAX reference of the shared-embedding forward.
    ref = jnp.einsum("bcpk,dk->bcpd", patch_input, weight) + bias
    assert out.shape == (bs, num_channels, num_patches, d_model)
    assert jnp.allclose(out, ref, atol=1e-4, rtol=1e-4), \
        float(jnp.max(jnp.abs(out - ref)))

    # share_embedding=False path (per-channel Linear), single fused pallas_call.
    weights_c = jax.random.uniform(
        k_wc, (num_channels, d_model, patch_length), minval=-bound,
        maxval=bound, dtype=jnp.float32)
    biases_c = jax.random.uniform(
        k_bc, (num_channels, d_model), minval=-bound, maxval=bound,
        dtype=jnp.float32)
    out_c = patchtst_embedding_per_channel(
        patch_input, weights_c, biases_c, min_rows_for_pallas=0)
    out_c = jax.block_until_ready(out_c)
    ref_c = (jnp.einsum("bcpk,cdk->bcpd", patch_input, weights_c)
             + biases_c[None, :, None, :])
    assert out_c.shape == (bs, num_channels, num_patches, d_model)
    assert jnp.allclose(out_c, ref_c, atol=1e-4, rtol=1e-4), \
        float(jnp.max(jnp.abs(out_c - ref_c)))

    print("KERNEL_OK")
</pallas_src>

<mosaic_0001>
module attributes {stable_mosaic.version = 11 : i64} {
  func.func @_embed_kernel(%arg0: i32, %arg1: memref<64x16xf32, #tpu.memory_space<vmem>>, %arg2: memref<16x128xf32, #tpu.memory_space<vmem>>, %arg3: memref<1x128xf32, #tpu.memory_space<vmem>>, %arg4: memref<64x128xf32, #tpu.memory_space<vmem>>) attributes {dimension_semantics = [#tpu.dimension_semantics<parallel>], iteration_bounds = array<i64: 1>, scalar_prefetch = 0 : i64, scratch_operands = 0 : i64, tpu.core_type = #tpu.core_type<tc>, window_params = [{transform_indices = @transform_0, window_bounds = array<i64: 64, 16>}, {pipeline_mode = #tpu.pipeline_mode<synchronous>, transform_indices = @transform_1, window_bounds = array<i64: 16, 128>}, {pipeline_mode = #tpu.pipeline_mode<synchronous>, transform_indices = @transform_2, window_bounds = array<i64: 1, 128>}, {transform_indices = @transform_3, window_bounds = array<i64: 64, 128>}]} {
    %c0 = arith.constant 0 : index
    %c0_0 = arith.constant 0 : index
    %0 = vector.load %arg1[%c0, %c0_0] : memref<64x16xf32, #tpu.memory_space<vmem>>, vector<64x16xf32>
    %c0_1 = arith.constant 0 : index
    %c0_2 = arith.constant 0 : index
    %1 = vector.load %arg2[%c0_1, %c0_2] : memref<16x128xf32, #tpu.memory_space<vmem>>, vector<16x128xf32>
    %cst = arith.constant dense<0.000000e+00> : vector<64x128xf32>
    %2 = tpu.matmul %0, %1, %cst {dimension_numbers = #tpu.dot_dimension_numbers<[1], [0], [0], [1], [0, 0, 1, 1], [], []>} : vector<64x16xf32>, vector<16x128xf32>, vector<64x128xf32> -> vector<64x128xf32>
    %c0_3 = arith.constant 0 : index
    %c0_4 = arith.constant 0 : index
    %3 = vector.load %arg3[%c0_3, %c0_4] : memref<1x128xf32, #tpu.memory_space<vmem>>, vector<1x128xf32>
    %4 = vector.broadcast %3 : vector<1x128xf32> to vector<64x128xf32>
    %5 = arith.addf %2, %4 : vector<64x128xf32>
    %c0_5 = arith.constant 0 : index
    %c0_6 = arith.constant 0 : index
    %6 = vector.load %arg4[%c0_5, %c0_6] : memref<64x128xf32, #tpu.memory_space<vmem>>, vector<64x128xf32>
    tpu.vector_store %arg4[%c0_5, %c0_6], %5 {strides = array<i32>} : memref<64x128xf32, #tpu.memory_space<vmem>>, vector<64x128xf32>,
    return
  }
  func.func @transform_0(%arg0: i32) -> (i32, i32) {
    %c0_i32 = arith.constant 0 : i32
    %c0_i32_0 = arith.constant 0 : i32
    return %arg0, %c0_i32 : i32, i32
  }
  func.func @transform_1(%arg0: i32) -> (i32, i32) {
    %c0_i32 = arith.constant 0 : i32
    %c0_i32_0 = arith.constant 0 : i32
    %c0_i32_1 = arith.constant 0 : i32
    return %c0_i32, %c0_i32_0 : i32, i32
  }
  func.func @transform_2(%arg0: i32) -> (i32, i32) {
    %c0_i32 = arith.constant 0 : i32
    %c0_i32_0 = arith.constant 0 : i32
    %c0_i32_1 = arith.constant 0 : i32
    return %c0_i32, %c0_i32_0 : i32, i32
  }
  func.func @transform_3(%arg0: i32) -> (i32, i32) {
    %c0_i32 = arith.constant 0 : i32
    %c0_i32_0 = arith.constant 0 : i32
    return %arg0, %c0_i32 : i32, i32
  }
}

</mosaic_0001>

<llo_original>
// kernel: tpu_custom_call.1
$region0: #{tpu_custom_call.1}
  #allocation0 [shape = 'u32[]', space=smem, size = 0x4, offset = 0x4, fixed_abs, tag = 'smem constant byte address 0x4 - core index']
  #allocation1 [shape = 'u32[144,128]{1,0:T(1,128)}', space=vmem, size = 0x12000, scoped, tag = 'internal scratch']
  %s0 = inlined_call_operand.vmem [shape: f32[64,16], index: 0, kind: input, shape index: {}]
  %s1 = inlined_call_operand.vmem [shape: f32[16,128], index: 1, kind: input, shape index: {}]
  %s2 = inlined_call_operand.vmem [shape: f32[1,128], index: 2, kind: input, shape index: {}]
  %s3 = inlined_call_operand.hbm [shape: f32[64,128], index: 3, kind: output, shape index: {}]
  %s4 = sld [smem:[#allocation0]]
  $region22: #{tpu_custom_call.1} parent=0
    _
  %s6 = ssub.s32 1, %s4
  %s7 = scalar_select 0, %s6, %s4
  $region1: #{tpu_custom_call.1} parent=0
    #allocation2 [shape = 'u8[32768]{0}', space=vmem, size = 0x8000, scoped, tag = 'output window, operand 0, single buffered']
    #allocation3 [shape = 's32[1]{0}', space=sflag, size = 0x4, scoped, tag = 'scoped memory for tpu_custom_call.1']
    %8 = vsyncpa [#allocation3], 0
    // Predicated region
    $region2: #{tpu_custom_call.1} parent=1 // pred_check
      _
    $region3: #{tpu_custom_call.1} parent=1 // pred_check_branch
      %10 = sbr.rel (0) target = $region5
    $region4: #{tpu_custom_call.1} parent=1 // pred_region
      _
    $region5: #{tpu_custom_call.1} parent=1 // pred_fallthru
      _
    // Predicated region
    $region6: #{tpu_custom_call.1} parent=1 // pred_check
      _
    $region7: #{tpu_custom_call.1} parent=1 // pred_check_branch
      %12 = sbr.rel (0) target = $region9
    $region8: #{tpu_custom_call.1} parent=1 // pred_region
      _
    $region9: #{tpu_custom_call.1} parent=1 // pred_fallthru
      _
    // Predicated region
    $region10: #{tpu_custom_call.1} parent=1 // pred_check
      _
    $region11: #{tpu_custom_call.1} parent=1 // pred_check_branch
      %14 = sbr.rel (0) target = $region13
    $region12: #{tpu_custom_call.1} parent=1 // pred_region
      _
    $region13: #{tpu_custom_call.1} parent=1 // pred_fallthru
      _
    %v15 = vld [vmem:[%s0] sm:$0xff]
    %v16 = vld [vmem:[%s0 + $0x8] sm:$0xff]
    %v17 = vld [vmem:[%s0 + $0x10] sm:$0xff]
    %v18 = vld [vmem:[%s0 + $0x18] sm:$0xff]
    %v19 = vld [vmem:[%s0 + $0x20] sm:$0xff]
    %v20 = vld [vmem:[%s0 + $0x28] sm:$0xff]
    %v21 = vld [vmem:[%s0 + $0x30] sm:$0xff]
    %v22 = vld [vmem:[%s0 + $0x38] sm:$0xff]
    %v23 = vld [vmem:[%s1] sm:$0xff]
    %v24 = vld [vmem:[%s1 + $0x8] sm:$0xff]
    %v25 = vld [vmem:[%s2] sm:$0x1]
    %v27 = vlaneseq
    %v28 = vshrl.u32 %v27, 7
    %v29 = vsub.s32 0, %v28
    %v30 = vrot.slane %v25, %v29
    %vm32 = vcmask 130048
    %v34 = vsel %vm32, %v15, 0
    %v37 = vsel %vm32, %v16, 0
    %v40 = vsel %vm32, %v17, 0
    %v43 = vsel %vm32, %v18, 0
    %v46 = vsel %vm32, %v19, 0
    %v49 = vsel %vm32, %v20, 0
    %v52 = vsel %vm32, %v21, 0
    %v55 = vsel %vm32, %v22, 0
    %57 = vmatprep.subr.mxu0 0.0
    %58 = vmatpush1.msra.mxu0 %v23
    %59 = vmatprep.subr.mxu0 0.0
    %60 = vmatpush1.msra.mxu0 %v24
    %61 = vmatprep.subr.mxu0 0.0
    %62 = vmatpush1.msra.mxu0 0.0
    %63 = vmatprep.subr.mxu0 0.0
    %64 = vmatpush1.msra.mxu0 0.0
    %65 = vmatprep.subr.mxu0 0.0
    %66 = vmatpush1.msra.mxu0 0.0
    %67 = vmatprep.subr.mxu0 0.0
    %68 = vmatpush1.msra.mxu0 0.0
    %69 = vmatprep.subr.mxu0 0.0
    %70 = vmatpush1.msra.mxu0 0.0
    %71 = vmatprep.subr.mxu0 0.0
    %72 = vmatpush1.msra.mxu0 0.0
    %73 = vmatprep.subr.mxu0 0.0
    %74 = vmatpush1.msra.mxu0 0.0
    %75 = vmatprep.subr.mxu0 0.0
    %76 = vmatpush1.msra.mxu0 0.0
    %77 = vmatprep.subr.mxu0 0.0
    %78 = vmatpush1.msra.mxu0 0.0
    %79 = vmatprep.subr.mxu0 0.0
    %80 = vmatpush1.msra.mxu0 0.0
    %81 = vmatprep.subr.mxu0 0.0
    %82 = vmatpush1.msra.mxu0 0.0
    %83 = vmatprep.subr.mxu0 0.0
    %84 = vmatpush1.msra.mxu0 0.0
    %85 = vmatprep.subr.mxu0 0.0
    %86 = vmatpush1.msra.mxu0 0.0
    %87 = vmatprep.subr.mxu0 0.0
    %88 = vmatpush1.msra.mxu0 0.0
    %89 = vmatprep.subr.mxu0 0.0
    %90 = vmatpush1.msra.mxu0 0.0
    %91 = vmatprep.subr.mxu0 0.0
    %92 = vmatpush1.msra.mxu0 0.0
    %93 = vmatprep.subr.mxu0 0.0
    %94 = vmatpush1.msra.mxu0 0.0
    %95 = vmatprep.subr.mxu0 0.0
    %96 = vmatpush1.msra.mxu0 0.0
    %97 = vmatprep.subr.mxu0 0.0
    %98 = vmatpush1.msra.mxu0 0.0
    %99 = vmatprep.subr.mxu0 0.0
    %100 = vmatpush1.msra.mxu0 0.0
    %101 = vmatprep.subr.mxu0 0.0
    %102 = vmatpush1.msra.mxu0 0.0
    %103 = vmatprep.subr.mxu0 0.0
    %104 = vmatpush1.msra.mxu0 0.0
    %105 = vmatprep.subr.mxu0 0.0
    %106 = vmatpush1.msra.mxu0 0.0
    %107 = vmatprep.subr.mxu0 0.0
    %108 = vmatpush1.msra.mxu0 0.0
    %109 = vmatprep.subr.mxu0 0.0
    %110 = vmatpush1.msra.mxu0 0.0
    %111 = vmatprep.subr.mxu0 0.0
    %112 = vmatpush1.msra.mxu0 0.0
    %113 = vmatprep.subr.mxu0 0.0
    %114 = vmatpush1.msra.mxu0 0.0
    %115 = vmatprep.subr.mxu0 0.0
    %116 = vmatpush1.msra.mxu0 0.0
    %117 = vmatprep.subr.mxu0 0.0
    %118 = vmatpush1.msra.mxu0 0.0
    %119 = vmatprep.subr.mxu0 0.0
    %120 = vmatpush1.msra.mxu0 0.0
    %121 = vmatprep.mubr.f32.mxu0 0.0
    %122 = vmatmul.mubr.f32.gmra.mrb[0].mxu0 %v34
    %v123 = vpop.f32.mrb[0].mxu0
    %v124 = vadd.f32 %v30, %v123
    %v125 = vpop.f32.mrb[0].mxu0
    %126 = vmatprep.mubr.f32.mxu0 0.0
    %127 = vmatmul.mubr.f32.gmra.mrb[0].mxu0 %v37
    %v128 = vpop.f32.mrb[0].mxu0
    %v129 = vadd.f32 %v30, %v128
    %v130 = vpop.f32.mrb[0].mxu0
    %131 = vmatprep.mubr.f32.mxu0 0.0
    %132 = vmatmul.mubr.f32.gmra.mrb[0].mxu0 %v40
    %v133 = vpop.f32.mrb[0].mxu0
    %v134 = vadd.f32 %v30, %v133
    %v135 = vpop.f32.mrb[0].mxu0
    %136 = vmatprep.mubr.f32.mxu0 0.0
    %137 = vmatmul.mubr.f32.gmra.mrb[0].mxu0 %v43
    %v138 = vpop.f32.mrb[0].mxu0
    %v139 = vadd.f32 %v30, %v138
    %v140 = vpop.f32.mrb[0].mxu0
    %141 = vmatprep.mubr.f32.mxu0 0.0
    %142 = vmatmul.mubr.f32.gmra.mrb[0].mxu0 %v46
    %v143 = vpop.f32.mrb[0].mxu0
    %v144 = vadd.f32 %v30, %v143
    %v145 = vpop.f32.mrb[0].mxu0
    %146 = vmatprep.mubr.f32.mxu0 0.0
    %147 = vmatmul.mubr.f32.gmra.mrb[0].mxu0 %v49
    %v148 = vpop.f32.mrb[0].mxu0
    %v149 = vadd.f32 %v30, %v148
    %v150 = vpop.f32.mrb[0].mxu0
    %151 = vmatprep.mubr.f32.mxu0 0.0
    %152 = vmatmul.mubr.f32.gmra.mrb[0].mxu0 %v52
    %v153 = vpop.f32.mrb[0].mxu0
    %v154 = vadd.f32 %v30, %v153
    %v155 = vpop.f32.mrb[0].mxu0
    %156 = vmatprep.mubr.f32.mxu0 0.0
    %157 = vmatmul.mubr.f32.gmra.mrb[0].mxu0 %v55
    %v158 = vpop.f32.mrb[0].mxu0
    %v159 = vadd.f32 %v30, %v158
    %v160 = vpop.f32.mrb[0].mxu0
    %161 = vdwg.mxu0
    %162 = vst [vmem:[#allocation2] sm:$0xff] %v124
    %163 = vst [vmem:[#allocation2 + $0x8] sm:$0xff] %v129
    %164 = vst [vmem:[#allocation2 + $0x10] sm:$0xff] %v134
    %165 = vst [vmem:[#allocation2 + $0x18] sm:$0xff] %v139
    %166 = vst [vmem:[#allocation2 + $0x20] sm:$0xff] %v144
    %167 = vst [vmem:[#allocation2 + $0x28] sm:$0xff] %v149
    %168 = vst [vmem:[#allocation2 + $0x30] sm:$0xff] %v154
    %169 = vst [vmem:[#allocation2 + $0x38] sm:$0xff] %v159
    // Predicated region
    $region14: #{tpu_custom_call.1} parent=1 // pred_check
      _
    $region15: #{tpu_custom_call.1} parent=1 // pred_check_branch
      %171 = sbr.rel (0) target = $region17
    $region16: #{tpu_custom_call.1} parent=1 // pred_region
      %s173 = ssub.s32 1024, 1024
      %174 = vsyncadd [#allocation3], %s173
      %s175 = sshll.u32 [#allocation2], 4
      %s176 = int_to_ptr.vmem [resolvable:$true] %s175
      %181 = dma.vmem_to_hbm [thread:$0]  %s176, 1024, %s3, [#allocation3], 128, 128, 8
    $region17: #{tpu_custom_call.1} parent=1 // pred_fallthru
      _
    // Predicated region
    $region18: #{tpu_custom_call.1} parent=1 // pred_check
      _
    $region19: #{tpu_custom_call.1} parent=1 // pred_check_branch
      %183 = sbr.rel (0) target = $region21
    $region20: #{tpu_custom_call.1} parent=1 // pred_region
      %184 = dma.done [#allocation3], 1024
    $region21: #{tpu_custom_call.1} parent=1 // pred_fallthru
      _
    %185 = vsyncpa [#allocation3], 1

</llo_original>
